<compile_context>
chip_gen: v6e
topology: v6e:2x2x1
jax: 0.10.0
libtpu: 0.0.40
codegen_flags: <defaults>
</compile_context>

<pallas_src>
import functools

import jax
import jax.numpy as jnp
from jax.experimental import pallas as pl
from jax.experimental.pallas import tpu as pltpu


# --------------------------------------------------------------------------- #
# Kernel
# --------------------------------------------------------------------------- #
def _ffn_kernel(x_ref, w1_ref, b1_ref, w2_ref, b2_ref, o_ref, acc_ref, *,
                negative_slope):
    # x_ref  : (tm, dm_pad)            activation tile (token rows)
    # w1_ref : (dm_pad, tf)            W1^T chunk  -> h_chunk = x @ w1_ref
    # b1_ref : (1, tf)                 b1 chunk
    # w2_ref : (tf, dm_pad)            W2^T chunk  -> y += h_chunk @ w2_ref
    # b2_ref : (1, dm_pad)
    # o_ref  : (tm, dm_pad)            output tile (resident across d_ff chunks)
    # acc_ref: (tm, dm_pad) f32        VMEM accumulator
    j = pl.program_id(1)

    @pl.when(j == 0)
    def _():
        acc_ref[...] = jnp.zeros_like(acc_ref)

    # Keep both matmuls on the weight dtype's native MXU path, f32 accumulate.
    x = x_ref[...].astype(w1_ref.dtype)
    h = jnp.dot(x, w1_ref[...], preferred_element_type=jnp.float32)
    h = h + b1_ref[...].astype(jnp.float32)

    # leaky_relu, negative_slope=0.2 (matches F.leaky_relu); elementwise along
    # d_ff so applying it per chunk is exact.
    h = jnp.where(h >= 0, h, h * negative_slope)

    # TODO(synk): training-mode dropout (pltpu.prng_seed + pltpu.prng_random_bits
    # mask scaled by 1/(1-p)); this kernel implements the eval/inference forward
    # (dropout == identity).

    h = h.astype(w2_ref.dtype)
    acc_ref[...] += jnp.dot(h, w2_ref[...], preferred_element_type=jnp.float32)

    @pl.when(j == pl.num_programs(1) - 1)
    def _():
        o_ref[...] = (acc_ref[...]
                      + b2_ref[...].astype(jnp.float32)).astype(o_ref.dtype)


# --------------------------------------------------------------------------- #
# Tiling helpers
# --------------------------------------------------------------------------- #
def _round_up(a, b):
    return -(-a // b) * b


def _sublane_align(dtype):
    # Sub-32-bit dtypes pack along sublanes: one vreg is (8 * 32/bits, 128).
    return 8 * (4 // jnp.dtype(dtype).itemsize)


def _pick_tile(n, max_tile, align):
    """Largest tile <= max_tile that is a multiple of `align` and divides the
    `align`-padded extent (prefers exact division -> no HBM pad copy)."""
    n_pad = _round_up(n, align)
    t = max(align, (min(max_tile, n_pad) // align) * align)
    while t > align and n_pad % t != 0:
        t -= align
    return t, n_pad


def prepare_params(w1, b1, w2, b2):
    """One-time parameter prep from PyTorch nn.Linear layout.

    w1: (d_ff, d_model), w2: (d_model, d_ff)  ->  (w1t, b1, w2t, b2)
    Do this once when loading weights, NOT per forward call.
    """
    return jnp.transpose(w1), b1, jnp.transpose(w2), b2


# --------------------------------------------------------------------------- #
# Wrapper
# --------------------------------------------------------------------------- #
def positionwise_feed_forward(x, w1t, b1, w2t, b2, *,
                              negative_slope=0.2, block_m=512, block_f=512):
    """Pallas TPU implementation of PositionwiseFeedForward.forward (eval mode).

    x   : (..., d_model)
    w1t : (d_model, d_ff)   == torch w_1.weight.T   (pre-transposed once)
    b1  : (d_ff,)
    w2t : (d_ff, d_model)   == torch w_2.weight.T   (pre-transposed once)
    b2  : (d_model,)
    returns: (..., d_model)
    """
    orig_shape = x.shape
    d_model = orig_shape[-1]
    d_ff = w1t.shape[1]
    assert w1t.shape == (d_model, d_ff), w1t.shape
    assert w2t.shape == (d_ff, d_model), w2t.shape

    x2 = x.reshape(-1, d_model)
    m = x2.shape[0]
    out_dtype = x.dtype

    # ---- tile / padding plan ------------------------------------------------
    align_m = _sublane_align(x.dtype)
    tm, m_pad = _pick_tile(m, block_m, align_m)
    # Megacore load balance (v7x: 2 TCs share the "parallel" axis): prefer at
    # least 2 token tiles when there is enough work for it to matter.
    if m_pad // tm < 2:
        half = m_pad // 2
        if half >= 128 and half % align_m == 0:
            tm = half

    tf, dff_pad = _pick_tile(d_ff, block_f, 128)   # d_ff chunk (lane dim of h)
    dm_pad = _round_up(d_model, 128)               # lane-dense loads/stores

    # ---- pad operands (no-op for typical transformer dims) ------------------
    if (m_pad, dm_pad) != (m, d_model):
        x2 = jnp.pad(x2, ((0, m_pad - m), (0, dm_pad - d_model)))
    if (dm_pad, dff_pad) != (d_model, d_ff):
        w1t = jnp.pad(w1t, ((0, dm_pad - d_model), (0, dff_pad - d_ff)))
        w2t = jnp.pad(w2t, ((0, dff_pad - d_ff), (0, dm_pad - d_model)))
    if dff_pad != d_ff:
        b1 = jnp.pad(b1, (0, dff_pad - d_ff))
    if dm_pad != d_model:
        b2 = jnp.pad(b2, (0, dm_pad - d_model))
    b1r = b1.reshape(1, dff_pad)
    b2r = b2.reshape(1, dm_pad)

    grid_m = m_pad // tm
    grid_f = dff_pad // tf
    grid = (grid_m, grid_f)

    # ---- cost estimate & VMEM budget ----------------------------------------
    flops = 4 * m_pad * dm_pad * dff_pad          # two matmuls
    w_bytes = (dm_pad * dff_pad * (w1t.dtype.itemsize + w2t.dtype.itemsize)
               + dff_pad * b1r.dtype.itemsize + dm_pad * b2r.dtype.itemsize)
    bytes_accessed = (m_pad * dm_pad * (x2.dtype.itemsize
                                        + jnp.dtype(out_dtype).itemsize)
                      + grid_m * w_bytes)         # weights re-streamed per tile

    # Per-step VMEM footprint: double-buffered pipeline blocks + f32 accumulator.
    est = (2 * tm * dm_pad * x2.dtype.itemsize
           + 2 * tm * dm_pad * jnp.dtype(out_dtype).itemsize
           + tm * dm_pad * 4
           + 2 * dm_pad * tf * w1t.dtype.itemsize
           + 2 * tf * dm_pad * w2t.dtype.itemsize
           + 2 * 8 * tf * b1r.dtype.itemsize
           + 2 * 8 * dm_pad * b2r.dtype.itemsize)
    try:
        vmem_cap = int(pltpu.get_tpu_info().vmem_capacity_bytes)
    except Exception:
        vmem_cap = 64 * 1024 * 1024               # conservative (v7x per-TC)
    vmem_limit = int(min(vmem_cap * 3 // 4,
                         max(32 * 1024 * 1024, est * 3 // 2)))

    kernel = functools.partial(_ffn_kernel, negative_slope=negative_slope)

    out = pl.pallas_call(
        kernel,
        out_shape=jax.ShapeDtypeStruct((m_pad, dm_pad), out_dtype),
        grid_spec=pltpu.PrefetchScalarGridSpec(
            num_scalar_prefetch=0,
            grid=grid,
            in_specs=[
                pl.BlockSpec((tm, dm_pad), lambda i, j: (i, 0)),   # x tile
                pl.BlockSpec((dm_pad, tf), lambda i, j: (0, j)),   # W1^T chunk
                pl.BlockSpec((1, tf),      lambda i, j: (0, j)),   # b1 chunk
                pl.BlockSpec((tf, dm_pad), lambda i, j: (j, 0)),   # W2^T chunk
                pl.BlockSpec((1, dm_pad),  lambda i, j: (0, 0)),   # b2
            ],
            out_specs=pl.BlockSpec((tm, dm_pad), lambda i, j: (i, 0)),
            scratch_shapes=[pltpu.VMEM((tm, dm_pad), jnp.float32)],
        ),
        compiler_params=pltpu.CompilerParams(
            dimension_semantics=("parallel", "arbitrary"),
            vmem_limit_bytes=vmem_limit),
        cost_estimate=pl.CostEstimate(
            flops=flops, transcendentals=0, bytes_accessed=bytes_accessed),
    )(x2, w1t, b1r, w2t, b2r)

    return out[:m, :d_model].reshape(orig_shape)


# --------------------------------------------------------------------------- #
# Pure-JAX reference (PyTorch module in eval mode: dropout = identity)
# --------------------------------------------------------------------------- #
def _reference_forward(x, w1, b1, w2, b2, negative_slope=0.2):
    h = jnp.einsum("...d,fd->...f", x, w1) + b1
    h = jnp.where(h >= 0, h, negative_slope * h)
    return jnp.einsum("...f,df->...d", h, w2) + b2


if __name__ == "__main__":
    key = jax.random.PRNGKey(0)
    kx, kw1, kb1, kw2, kb2 = jax.random.split(key, 5)

    B, S, d_model, d_ff = 2, 8, 32, 64
    x = jax.random.normal(kx, (B, S, d_model), dtype=jnp.float32)
    # PyTorch nn.Linear layout: weight is (out_features, in_features)
    w1 = jax.random.normal(kw1, (d_ff, d_model), dtype=jnp.float32) * 0.1
    b1 = jax.random.normal(kb1, (d_ff,), dtype=jnp.float32) * 0.1
    w2 = jax.random.normal(kw2, (d_model, d_ff), dtype=jnp.float32) * 0.1
    b2 = jax.random.normal(kb2, (d_model,), dtype=jnp.float32) * 0.1

    # One-time parameter prep (pre-transpose; NOT in the per-call hot path).
    w1t, b1p, w2t, b2p = prepare_params(w1, b1, w2, b2)

    out = positionwise_feed_forward(x, w1t, b1p, w2t, b2p)
    out = jax.block_until_ready(out)

    ref = _reference_forward(x, w1, b1, w2, b2)
    assert out.shape == ref.shape
    assert jnp.allclose(out, ref, atol=1e-5, rtol=1e-5), "mismatch vs reference"

    print("KERNEL_OK")
</pallas_src>

<mosaic_0001>
module attributes {stable_mosaic.version = 11 : i64} {
  func.func @_ffn_kernel(%arg0: i32, %arg1: i32, %arg2: memref<16x128xf32, #tpu.memory_space<vmem>>, %arg3: memref<128x128xf32, #tpu.memory_space<vmem>>, %arg4: memref<1x128xf32, #tpu.memory_space<vmem>>, %arg5: memref<128x128xf32, #tpu.memory_space<vmem>>, %arg6: memref<1x128xf32, #tpu.memory_space<vmem>>, %arg7: memref<16x128xf32, #tpu.memory_space<vmem>>, %arg8: memref<16x128xf32, #tpu.memory_space<vmem>>) attributes {dimension_semantics = [#tpu.dimension_semantics<parallel>, #tpu.dimension_semantics<arbitrary>], iteration_bounds = array<i64: 1, 1>, scalar_prefetch = 0 : i64, scratch_operands = 1 : i64, tpu.core_type = #tpu.core_type<tc>, window_params = [{transform_indices = @transform_0, window_bounds = array<i64: 16, 128>}, {transform_indices = @transform_1, window_bounds = array<i64: 128, 128>}, {transform_indices = @transform_2, window_bounds = array<i64: 1, 128>}, {transform_indices = @transform_3, window_bounds = array<i64: 128, 128>}, {pipeline_mode = #tpu.pipeline_mode<synchronous>, transform_indices = @transform_4, window_bounds = array<i64: 1, 128>}, {transform_indices = @transform_5, window_bounds = array<i64: 16, 128>}]} {
    %c0_i32 = arith.constant 0 : i32
    %0 = arith.cmpi eq, %arg1, %c0_i32 : i32
    %1 = arith.extui %0 : i1 to i32
    %c0_i32_0 = arith.constant 0 : i32
    %2 = arith.cmpi ne, %1, %c0_i32_0 : i32
    scf.if %2 {
      %cst_17 = arith.constant 0.000000e+00 : f32
      %22 = vector.broadcast %cst_17 : f32 to vector<16x128xf32>
      %c0_18 = arith.constant 0 : index
      %c0_19 = arith.constant 0 : index
      %23 = vector.load %arg8[%c0_18, %c0_19] : memref<16x128xf32, #tpu.memory_space<vmem>>, vector<16x128xf32>
      tpu.vector_store %arg8[%c0_18, %c0_19], %22 {strides = array<i32>} : memref<16x128xf32, #tpu.memory_space<vmem>>, vector<16x128xf32>,
    } else {
    }
    %c0 = arith.constant 0 : index
    %c0_1 = arith.constant 0 : index
    %3 = vector.load %arg2[%c0, %c0_1] : memref<16x128xf32, #tpu.memory_space<vmem>>, vector<16x128xf32>
    %c0_2 = arith.constant 0 : index
    %c0_3 = arith.constant 0 : index
    %4 = vector.load %arg3[%c0_2, %c0_3] : memref<128x128xf32, #tpu.memory_space<vmem>>, vector<128x128xf32>
    %cst = arith.constant dense<0.000000e+00> : vector<16x128xf32>
    %5 = tpu.matmul %3, %4, %cst {dimension_numbers = #tpu.dot_dimension_numbers<[1], [0], [0], [1], [0, 0, 1, 1], [], []>} : vector<16x128xf32>, vector<128x128xf32>, vector<16x128xf32> -> vector<16x128xf32>
    %c0_4 = arith.constant 0 : index
    %c0_5 = arith.constant 0 : index
    %6 = vector.load %arg4[%c0_4, %c0_5] : memref<1x128xf32, #tpu.memory_space<vmem>>, vector<1x128xf32>
    %7 = vector.broadcast %6 : vector<1x128xf32> to vector<16x128xf32>
    %8 = arith.addf %5, %7 : vector<16x128xf32>
    %cst_6 = arith.constant 0.000000e+00 : f32
    %9 = vector.broadcast %cst_6 : f32 to vector<16x128xf32>
    %10 = arith.cmpf oge, %8, %9 : vector<16x128xf32>
    %cst_7 = arith.constant 2.000000e-01 : f32
    %11 = vector.broadcast %cst_7 : f32 to vector<16x128xf32>
    %12 = arith.mulf %8, %11 : vector<16x128xf32>
    %13 = arith.select %10, %8, %12 : vector<16x128xi1>, vector<16x128xf32>
    %c0_8 = arith.constant 0 : index
    %c0_9 = arith.constant 0 : index
    %14 = vector.load %arg8[%c0_8, %c0_9] : memref<16x128xf32, #tpu.memory_space<vmem>>, vector<16x128xf32>
    %c0_10 = arith.constant 0 : index
    %c0_11 = arith.constant 0 : index
    %15 = vector.load %arg5[%c0_10, %c0_11] : memref<128x128xf32, #tpu.memory_space<vmem>>, vector<128x128xf32>
    %cst_12 = arith.constant dense<0.000000e+00> : vector<16x128xf32>
    %16 = tpu.matmul %13, %15, %cst_12 {dimension_numbers = #tpu.dot_dimension_numbers<[1], [0], [0], [1], [0, 0, 1, 1], [], []>} : vector<16x128xf32>, vector<128x128xf32>, vector<16x128xf32> -> vector<16x128xf32>
    %17 = arith.addf %14, %16 : vector<16x128xf32>
    %c0_13 = arith.constant 0 : index
    %c0_14 = arith.constant 0 : index
    %18 = vector.load %arg8[%c0_13, %c0_14] : memref<16x128xf32, #tpu.memory_space<vmem>>, vector<16x128xf32>
    tpu.vector_store %arg8[%c0_13, %c0_14], %17 {strides = array<i32>} : memref<16x128xf32, #tpu.memory_space<vmem>>, vector<16x128xf32>,
    %c0_i32_15 = arith.constant 0 : i32
    %19 = arith.cmpi eq, %arg1, %c0_i32_15 : i32
    %20 = arith.extui %19 : i1 to i32
    %c0_i32_16 = arith.constant 0 : i32
    %21 = arith.cmpi ne, %20, %c0_i32_16 : i32
    scf.if %21 {
      %c0_17 = arith.constant 0 : index
      %c0_18 = arith.constant 0 : index
      %22 = vector.load %arg8[%c0_17, %c0_18] : memref<16x128xf32, #tpu.memory_space<vmem>>, vector<16x128xf32>
      %c0_19 = arith.constant 0 : index
      %c0_20 = arith.constant 0 : index
      %23 = vector.load %arg6[%c0_19, %c0_20] : memref<1x128xf32, #tpu.memory_space<vmem>>, vector<1x128xf32>
      %24 = vector.broadcast %23 : vector<1x128xf32> to vector<16x128xf32>
      %25 = arith.addf %22, %24 : vector<16x128xf32>
      %c0_21 = arith.constant 0 : index
      %c0_22 = arith.constant 0 : index
      %26 = vector.load %arg7[%c0_21, %c0_22] : memref<16x128xf32, #tpu.memory_space<vmem>>, vector<16x128xf32>
      tpu.vector_store %arg7[%c0_21, %c0_22], %25 {strides = array<i32>} : memref<16x128xf32, #tpu.memory_space<vmem>>, vector<16x128xf32>,
    } else {
    }
    return
  }
  func.func @transform_0(%arg0: i32, %arg1: i32) -> (i32, i32) {
    %c0_i32 = arith.constant 0 : i32
    %c0_i32_0 = arith.constant 0 : i32
    return %arg0, %c0_i32 : i32, i32
  }
  func.func @transform_1(%arg0: i32, %arg1: i32) -> (i32, i32) {
    %c0_i32 = arith.constant 0 : i32
    %c0_i32_0 = arith.constant 0 : i32
    return %c0_i32, %arg1 : i32, i32
  }
  func.func @transform_2(%arg0: i32, %arg1: i32) -> (i32, i32) {
    %c0_i32 = arith.constant 0 : i32
    %c0_i32_0 = arith.constant 0 : i32
    return %c0_i32, %arg1 : i32, i32
  }
  func.func @transform_3(%arg0: i32, %arg1: i32) -> (i32, i32) {
    %c0_i32 = arith.constant 0 : i32
    %c0_i32_0 = arith.constant 0 : i32
    return %arg1, %c0_i32 : i32, i32
  }
  func.func @transform_4(%arg0: i32, %arg1: i32) -> (i32, i32) {
    %c0_i32 = arith.constant 0 : i32
    %c0_i32_0 = arith.constant 0 : i32
    %c0_i32_1 = arith.constant 0 : i32
    return %c0_i32, %c0_i32_0 : i32, i32
  }
  func.func @transform_5(%arg0: i32, %arg1: i32) -> (i32, i32) {
    %c0_i32 = arith.constant 0 : i32
    %c0_i32_0 = arith.constant 0 : i32
    return %arg0, %c0_i32 : i32, i32
  }
}

</mosaic_0001>

<llo_original>
// kernel: tpu_custom_call.1
$region0: #{tpu_custom_call.1}
  #allocation0 [shape = 'u32[]', space=smem, size = 0x4, offset = 0x4, fixed_abs, tag = 'smem constant byte address 0x4 - core index']
  #allocation1 [shape = 'u32[144,128]{1,0:T(1,128)}', space=vmem, size = 0x12000, scoped, tag = 'internal scratch']
  #allocation2 [shape = 'f32[16,128]{1,0:T(8,128)}', space=vmem, size = 0x2000, scoped, tag = 'scratch operand']
  %s0 = inlined_call_operand.hbm [shape: f32[16,128], index: 0, kind: input, shape index: {}]
  %s1 = inlined_call_operand.hbm [shape: f32[128,128], index: 1, kind: input, shape index: {}]
  %s2 = inlined_call_operand.vmem [shape: f32[1,128], index: 2, kind: input, shape index: {}]
  %s3 = inlined_call_operand.hbm [shape: f32[128,128], index: 3, kind: input, shape index: {}]
  %s4 = inlined_call_operand.vmem [shape: f32[1,128], index: 4, kind: input, shape index: {}]
  %s5 = inlined_call_operand.hbm [shape: f32[16,128], index: 5, kind: output, shape index: {}]
  %s6 = sld [smem:[#allocation0]]
  $region50: #{tpu_custom_call.1} parent=0
    _
  %s8 = ssub.s32 1, %s6
  %s9 = scalar_select 0, %s8, %s6
  $region1: #{tpu_custom_call.1} parent=0
    #allocation3 [shape = 'u8[8192]{0}', space=vmem, size = 0x2000, scoped, tag = 'input window, operand 0, single buffered']
    #allocation4 [shape = 's32[1]{0}', space=sflag, size = 0x4, scoped, tag = 'scoped memory for tpu_custom_call.1']
    #allocation5 [shape = 's32[1]{0}', space=sflag, size = 0x4, scoped, tag = 'scoped memory for tpu_custom_call.1']
    #allocation6 [shape = 'u8[65536]{0}', space=vmem, size = 0x10000, scoped, tag = 'input window, operand 1, single buffered']
    #allocation7 [shape = 's32[1]{0}', space=sflag, size = 0x4, scoped, tag = 'scoped memory for tpu_custom_call.1']
    #allocation8 [shape = 'u8[65536]{0}', space=vmem, size = 0x10000, scoped, tag = 'input window, operand 3, single buffered']
    #allocation9 [shape = 'u8[8192]{0}', space=vmem, size = 0x2000, scoped, tag = 'output window, operand 0, single buffered']
    %10 = vsyncpa [#allocation4], 0
    %11 = vsyncpa [#allocation7], 0
    %12 = vsyncpa [#allocation5], 0
    // Predicated region
    $region2: #{tpu_custom_call.1} parent=1 // pred_check
      _
    $region3: #{tpu_custom_call.1} parent=1 // pred_check_branch
      %14 = sbr.rel (0) target = $region5
    $region4: #{tpu_custom_call.1} parent=1 // pred_region
      %s16 = ssub.s32 256, 256
      %17 = vsyncadd [#allocation4], %s16
      %s18 = sshll.u32 [#allocation3], 4
      %s19 = int_to_ptr.vmem [resolvable:$true] %s18
      %24 = dma.hbm_to_vmem [thread:$0]  %s0, 256, %s19, [#allocation4], 128, 128, 8
    $region5: #{tpu_custom_call.1} parent=1 // pred_fallthru
      _
    // Predicated region
    $region6: #{tpu_custom_call.1} parent=1 // pred_check
      _
    $region7: #{tpu_custom_call.1} parent=1 // pred_check_branch
      %26 = sbr.rel (0) target = $region9
    $region8: #{tpu_custom_call.1} parent=1 // pred_region
      %s28 = ssub.s32 2048, 2048
      %29 = vsyncadd [#allocation7], %s28
      %s30 = sshll.u32 [#allocation6], 4
      %s31 = int_to_ptr.vmem [resolvable:$true] %s30
      %36 = dma.hbm_to_vmem [thread:$0]  %s1, 2048, %s31, [#allocation7], 128, 128, 8
    $region9: #{tpu_custom_call.1} parent=1 // pred_fallthru
      _
    // Predicated region
    $region10: #{tpu_custom_call.1} parent=1 // pred_check
      _
    $region11: #{tpu_custom_call.1} parent=1 // pred_check_branch
      %38 = sbr.rel (0) target = $region13
    $region12: #{tpu_custom_call.1} parent=1 // pred_region
      _
    $region13: #{tpu_custom_call.1} parent=1 // pred_fallthru
      _
    // Predicated region
    $region14: #{tpu_custom_call.1} parent=1 // pred_check
      _
    $region15: #{tpu_custom_call.1} parent=1 // pred_check_branch
      %40 = sbr.rel (0) target = $region17
    $region16: #{tpu_custom_call.1} parent=1 // pred_region
      %s42 = ssub.s32 2048, 2048
      %43 = vsyncadd [#allocation7], %s42
      %s44 = sshll.u32 [#allocation8], 4
      %s45 = int_to_ptr.vmem [resolvable:$true] %s44
      %50 = dma.hbm_to_vmem [thread:$0]  %s3, 2048, %s45, [#allocation7], 128, 128, 8
    $region17: #{tpu_custom_call.1} parent=1 // pred_fallthru
      _
    // Predicated region
    $region18: #{tpu_custom_call.1} parent=1 // pred_check
      _
    $region19: #{tpu_custom_call.1} parent=1 // pred_check_branch
      %52 = sbr.rel (0) target = $region21
    $region20: #{tpu_custom_call.1} parent=1 // pred_region
      _
    $region21: #{tpu_custom_call.1} parent=1 // pred_fallthru
      _
    // Predicated region
    $region22: #{tpu_custom_call.1} parent=1 // pred_check
      _
    $region23: #{tpu_custom_call.1} parent=1 // pred_check_branch
      %54 = sbr.rel (0) target = $region25
    $region24: #{tpu_custom_call.1} parent=1 // pred_region
      %55 = dma.done [#allocation4], 256
    $region25: #{tpu_custom_call.1} parent=1 // pred_fallthru
      _
    // Predicated region
    $region26: #{tpu_custom_call.1} parent=1 // pred_check
      _
    $region27: #{tpu_custom_call.1} parent=1 // pred_check_branch
      %57 = sbr.rel (0) target = $region29
    $region28: #{tpu_custom_call.1} parent=1 // pred_region
      %58 = dma.done [#allocation7], 2048
    $region29: #{tpu_custom_call.1} parent=1 // pred_fallthru
      _
    // Predicated region
    $region30: #{tpu_custom_call.1} parent=1 // pred_check
      _
    $region31: #{tpu_custom_call.1} parent=1 // pred_check_branch
      %60 = sbr.rel (0) target = $region33
    $region32: #{tpu_custom_call.1} parent=1 // pred_region
      %61 = dma.done [#allocation7], 2048
    $region33: #{tpu_custom_call.1} parent=1 // pred_fallthru
      _
    %p62 = scmp.eq.s32.totalorder 0, 0
    // Predicated region
    $region34: #{tpu_custom_call.1} parent=1 // pred_check
      %p63 = pneg %p62
    $region35: #{tpu_custom_call.1} parent=1 // pred_check_branch
      %65 = sbr.rel (%p63) target = $region37
    $region36: #{tpu_custom_call.1} parent=1 // pred_region
      %66 = vst [vmem:[#allocation2] sm:$0xff] 0.0
      %67 = vst [vmem:[#allocation2 + $0x8] sm:$0xff] 0.0
    $region37: #{tpu_custom_call.1} parent=1 // pred_fallthru
      _
    %v68 = vld [vmem:[#allocation3] sm:$0xff]
    %v69 = vld [vmem:[#allocation3 + $0x8] sm:$0xff]
    %v70 = vld [vmem:[#allocation6] sm:$0xff]
    %v71 = vld [vmem:[#allocation6 + $0x8] sm:$0xff]
    %v72 = vld [vmem:[#allocation6 + $0x10] sm:$0xff]
    %v73 = vld [vmem:[#allocation6 + $0x18] sm:$0xff]
    %v74 = vld [vmem:[#allocation6 + $0x20] sm:$0xff]
    %v75 = vld [vmem:[#allocation6 + $0x28] sm:$0xff]
    %v76 = vld [vmem:[#allocation6 + $0x30] sm:$0xff]
    %v77 = vld [vmem:[#allocation6 + $0x38] sm:$0xff]
    %v78 = vld [vmem:[#allocation6 + $0x40] sm:$0xff]
    %v79 = vld [vmem:[#allocation6 + $0x48] sm:$0xff]
    %v80 = vld [vmem:[#allocation6 + $0x50] sm:$0xff]
    %v81 = vld [vmem:[#allocation6 + $0x58] sm:$0xff]
    %v82 = vld [vmem:[#allocation6 + $0x60] sm:$0xff]
    %v83 = vld [vmem:[#allocation6 + $0x68] sm:$0xff]
    %v84 = vld [vmem:[#allocation6 + $0x70] sm:$0xff]
    %v85 = vld [vmem:[#allocation6 + $0x78] sm:$0xff]
    %v86 = vld [vmem:[%s2] sm:$0x1]
    %v88 = vlaneseq
    %v89 = vshrl.u32 %v88, 7
    %v90 = vsub.s32 0, %v89
    %v91 = vrot.slane %v86, %v90
    %93 = vmatprep.subr.mxu0 0.0
    %94 = vmatpush1.msra.mxu0 %v85
    %95 = vmatprep.subr.mxu0 0.0
    %96 = vmatpush1.msra.mxu0 %v84
    %97 = vmatprep.subr.mxu0 0.0
    %98 = vmatpush1.msra.mxu0 %v83
    %99 = vmatprep.subr.mxu0 0.0
    %100 = vmatpush1.msra.mxu0 %v82
    %101 = vmatprep.subr.mxu0 0.0
    %102 = vmatpush1.msra.mxu0 %v81
    %103 = vmatprep.subr.mxu0 0.0
    %104 = vmatpush1.msra.mxu0 %v80
    %105 = vmatprep.subr.mxu0 0.0
    %106 = vmatpush1.msra.mxu0 %v79
    %107 = vmatprep.subr.mxu0 0.0
    %108 = vmatpush1.msra.mxu0 %v78
    %109 = vmatprep.subr.mxu0 0.0
    %110 = vmatpush1.msra.mxu0 %v77
    %111 = vmatprep.subr.mxu0 0.0
    %112 = vmatpush1.msra.mxu0 %v76
    %113 = vmatprep.subr.mxu0 0.0
    %114 = vmatpush1.msra.mxu0 %v75
    %115 = vmatprep.subr.mxu0 0.0
    %116 = vmatpush1.msra.mxu0 %v74
    %117 = vmatprep.subr.mxu0 0.0
    %118 = vmatpush1.msra.mxu0 %v73
    %119 = vmatprep.subr.mxu0 0.0
    %120 = vmatpush1.msra.mxu0 %v72
    %121 = vmatprep.subr.mxu0 0.0
    %122 = vmatpush1.msra.mxu0 %v71
    %123 = vmatprep.subr.mxu0 0.0
    %124 = vmatpush1.msra.mxu0 %v70
    %125 = vmatprep.subr.mxu0 0.0
    %126 = vmatpush2.msra.mxu0 0.0
    %127 = vmatprep.subr.mxu0 0.0
    %128 = vmatpush2.msra.mxu0 0.0
    %129 = vmatprep.subr.mxu0 0.0
    %130 = vmatpush2.msra.mxu0 0.0
    %131 = vmatprep.subr.mxu0 0.0
    %132 = vmatpush2.msra.mxu0 0.0
    %133 = vmatprep.subr.mxu0 0.0
    %134 = vmatpush2.msra.mxu0 0.0
    %135 = vmatprep.subr.mxu0 0.0
    %136 = vmatpush2.msra.mxu0 0.0
    %137 = vmatprep.subr.mxu0 0.0
    %138 = vmatpush2.msra.mxu0 0.0
    %139 = vmatprep.subr.mxu0 0.0
    %140 = vmatpush2.msra.mxu0 0.0
    %141 = vmatprep.subr.mxu0 0.0
    %142 = vmatpush2.msra.mxu0 0.0
    %143 = vmatprep.subr.mxu0 0.0
    %144 = vmatpush2.msra.mxu0 0.0
    %145 = vmatprep.subr.mxu0 0.0
    %146 = vmatpush2.msra.mxu0 0.0
    %147 = vmatprep.subr.mxu0 0.0
    %148 = vmatpush2.msra.mxu0 0.0
    %149 = vmatprep.subr.mxu0 0.0
    %150 = vmatpush2.msra.mxu0 0.0
    %151 = vmatprep.subr.mxu0 0.0
    %152 = vmatpush2.msra.mxu0 0.0
    %153 = vmatprep.subr.mxu0 0.0
    %154 = vmatpush2.msra.mxu0 0.0
    %155 = vmatprep.subr.mxu0 0.0
    %156 = vmatpush2.msra.mxu0 0.0
    %157 = vmatprep.mubr.f32.mxu0 0.0
    %158 = vmatmul.mubr.f32.gmra.mxu0 %v68
    %v159 = vpop.f32.mrf.mxu0
    %v160 = vadd.f32 %v91, %v159
    %v161 = vpop.f32.mrf.mxu0
    %162 = vmatprep.mubr.f32.mxu0 0.0
    %163 = vmatmul.mubr.f32.gmra.mxu0 %v69
    %v164 = vpop.f32.mrf.mxu0
    %v165 = vadd.f32 %v91, %v164
    %v166 = vpop.f32.mrf.mxu0
    %167 = vdwg.mxu0
    %vm168 = vcmp.ge.f32.partialorder %v160, 0.0
    %vm169 = vcmp.ge.f32.partialorder %v165, 0.0
    %v170 = vmul.f32 %v160, 0.2
    %v171 = vmul.f32 %v165, 0.2
    %v172 = vsel %vm168, %v160, %v170
    %v173 = vsel %vm169, %v165, %v171
    %v174 = vld [vmem:[#allocation2] sm:$0xff]
    %v175 = vld [vmem:[#allocation2 + $0x8] sm:$0xff]
    %v176 = vld [vmem:[#allocation8] sm:$0xff]
    %v177 = vld [vmem:[#allocation8 + $0x8] sm:$0xff]
    %v178 = vld [vmem:[#allocation8 + $0x10] sm:$0xff]
    %v179 = vld [vmem:[#allocation8 + $0x18] sm:$0xff]
    %v180 = vld [vmem:[#allocation8 + $0x20] sm:$0xff]
    %v181 = vld [vmem:[#allocation8 + $0x28] sm:$0xff]
    %v182 = vld [vmem:[#allocation8 + $0x30] sm:$0xff]
    %v183 = vld [vmem:[#allocation8 + $0x38] sm:$0xff]
    %v184 = vld [vmem:[#allocation8 + $0x40] sm:$0xff]
    %v185 = vld [vmem:[#allocation8 + $0x48] sm:$0xff]
    %v186 = vld [vmem:[#allocation8 + $0x50] sm:$0xff]
    %v187 = vld [vmem:[#allocation8 + $0x58] sm:$0xff]
    %v188 = vld [vmem:[#allocation8 + $0x60] sm:$0xff]
    %v189 = vld [vmem:[#allocation8 + $0x68] sm:$0xff]
    %v190 = vld [vmem:[#allocation8 + $0x70] sm:$0xff]
    %v191 = vld [vmem:[#allocation8 + $0x78] sm:$0xff]
    %192 = vmatprep.subr.mxu0 0.0
    %193 = vmatpush1.msra.mxu0 %v191
    %194 = vmatprep.subr.mxu0 0.0
    %195 = vmatpush1.msra.mxu0 %v190
    %196 = vmatprep.subr.mxu0 0.0
    %197 = vmatpush1.msra.mxu0 %v189
    %198 = vmatprep.subr.mxu0 0.0
    %199 = vmatpush1.msra.mxu0 %v188
    %200 = vmatprep.subr.mxu0 0.0
    %201 = vmatpush1.msra.mxu0 %v187
    %202 = vmatprep.subr.mxu0 0.0
    %203 = vmatpush1.msra.mxu0 %v186
    %204 = vmatprep.subr.mxu0 0.0
    %205 = vmatpush1.msra.mxu0 %v185
    %206 = vmatprep.subr.mxu0 0.0
    %207 = vmatpush1.msra.mxu0 %v184
    %208 = vmatprep.subr.mxu0 0.0
    %209 = vmatpush1.msra.mxu0 %v183
    %210 = vmatprep.subr.mxu0 0.0
    %211 = vmatpush1.msra.mxu0 %v182
    %212 = vmatprep.subr.mxu0 0.0
    %213 = vmatpush1.msra.mxu0 %v181
    %214 = vmatprep.subr.mxu0 0.0
    %215 = vmatpush1.msra.mxu0 %v180
    %216 = vmatprep.subr.mxu0 0.0
    %217 = vmatpush1.msra.mxu0 %v179
    %218 = vmatprep.subr.mxu0 0.0
    %219 = vmatpush1.msra.mxu0 %v178
    %220 = vmatprep.subr.mxu0 0.0
    %221 = vmatpush1.msra.mxu0 %v177
    %222 = vmatprep.subr.mxu0 0.0
    %223 = vmatpush1.msra.mxu0 %v176
    %224 = vmatprep.subr.mxu0 0.0
    %225 = vmatpush2.msra.mxu0 0.0
    %226 = vmatprep.subr.mxu0 0.0
    %227 = vmatpush2.msra.mxu0 0.0
    %228 = vmatprep.subr.mxu0 0.0
    %229 = vmatpush2.msra.mxu0 0.0
    %230 = vmatprep.subr.mxu0 0.0
    %231 = vmatpush2.msra.mxu0 0.0
    %232 = vmatprep.subr.mxu0 0.0
    %233 = vmatpush2.msra.mxu0 0.0
    %234 = vmatprep.subr.mxu0 0.0
    %235 = vmatpush2.msra.mxu0 0.0
    %236 = vmatprep.subr.mxu0 0.0
    %237 = vmatpush2.msra.mxu0 0.0
    %238 = vmatprep.subr.mxu0 0.0
    %239 = vmatpush2.msra.mxu0 0.0
    %240 = vmatprep.subr.mxu0 0.0
    %241 = vmatpush2.msra.mxu0 0.0
    %242 = vmatprep.subr.mxu0 0.0
    %243 = vmatpush2.msra.mxu0 0.0
    %244 = vmatprep.subr.mxu0 0.0
    %245 = vmatpush2.msra.mxu0 0.0
    %246 = vmatprep.subr.mxu0 0.0
    %247 = vmatpush2.msra.mxu0 0.0
    %248 = vmatprep.subr.mxu0 0.0
    %249 = vmatpush2.msra.mxu0 0.0
    %250 = vmatprep.subr.mxu0 0.0
    %251 = vmatpush2.msra.mxu0 0.0
    %252 = vmatprep.subr.mxu0 0.0
    %253 = vmatpush2.msra.mxu0 0.0
    %254 = vmatprep.subr.mxu0 0.0
    %255 = vmatpush2.msra.mxu0 0.0
    %256 = vmatprep.mubr.f32.mxu0 0.0
    %257 = vmatmul.mubr.f32.gmra.mxu0 %v172
    %v258 = vpop.f32.mrf.mxu0
    %v259 = vadd.f32 0.0, %v258
    %v260 = vpop.f32.mrf.mxu0
    %261 = vmatprep.mubr.f32.mxu0 0.0
    %262 = vmatmul.mubr.f32.gmra.mxu0 %v173
    %v263 = vpop.f32.mrf.mxu0
    %v264 = vadd.f32 0.0, %v263
    %v265 = vpop.f32.mrf.mxu0
    %266 = vdwg.mxu0
    %v267 = vadd.f32 %v174, %v259
    %v268 = vadd.f32 %v175, %v264
    %269 = vst [vmem:[#allocation2] sm:$0xff] %v267
    %270 = vst [vmem:[#allocation2 + $0x8] sm:$0xff] %v268
    // Predicated region
    $region38: #{tpu_custom_call.1} parent=1 // pred_check
      %p271 = pneg %p62
    $region39: #{tpu_custom_call.1} parent=1 // pred_check_branch
      %273 = sbr.rel (%p271) target = $region41
    $region40: #{tpu_custom_call.1} parent=1 // pred_region
      %v274 = vld [vmem:[#allocation2] sm:$0xff]
      %v275 = vld [vmem:[#allocation2 + $0x8] sm:$0xff]
      %v276 = vld [vmem:[%s4] sm:$0x1]
      %v278 = vlaneseq
      %v279 = vshrl.u32 %v278, 7
      %v280 = vsub.s32 0, %v279
      %v281 = vrot.slane %v276, %v280
      %v283 = vadd.f32 %v274, %v281
      %v284 = vadd.f32 %v275, %v281
      %285 = vst [vmem:[#allocation9] sm:$0xff] %v283
      %286 = vst [vmem:[#allocation9 + $0x8] sm:$0xff] %v284
    $region41: #{tpu_custom_call.1} parent=1 // pred_fallthru
      _
    // Predicated region
    $region42: #{tpu_custom_call.1} parent=1 // pred_check
      _
    $region43: #{tpu_custom_call.1} parent=1 // pred_check_branch
      %288 = sbr.rel (0) target = $region45
    $region44: #{tpu_custom_call.1} parent=1 // pred_region
      %s290 = ssub.s32 256, 256
      %291 = vsyncadd [#allocation5], %s290
      %s292 = sshll.u32 [#allocation9], 4
      %s293 = int_to_ptr.vmem [resolvable:$true] %s292
      %298 = dma.vmem_to_hbm [thread:$0]  %s293, 256, %s5, [#allocation5], 128, 128, 8
    $region45: #{tpu_custom_call.1} parent=1 // pred_fallthru
      _
    // Predicated region
    $region46: #{tpu_custom_call.1} parent=1 // pred_check
      _
    $region47: #{tpu_custom_call.1} parent=1 // pred_check_branch
      %300 = sbr.rel (0) target = $region49
    $region48: #{tpu_custom_call.1} parent=1 // pred_region
      %301 = dma.done [#allocation5], 256
    $region49: #{tpu_custom_call.1} parent=1 // pred_fallthru
      _
    %302 = vsyncpa [#allocation4], 1
    %303 = vsyncpa [#allocation7], 1
    %304 = vsyncpa [#allocation5], 1

</llo_original>
